<compile_context>
chip_gen: v7x
topology: tpu7x:2x2x1
jax: 0.10.0
libtpu: 0.0.40
codegen_flags: <defaults>
</compile_context>

<pallas_src>
import jax
import jax.numpy as jnp
from jax.experimental import pallas as pl
from jax.experimental.pallas import tpu as pltpu


# --------------------------------------------------------------------------- #
# Helpers
# --------------------------------------------------------------------------- #
def _round_up(x, m):
    return ((x + m - 1) // m) * m


def _pick_seq_tile(s, target=512, align=8):
    """Largest tile <= target that divides s and is a multiple of `align`.
    Falls back to s itself (full-extent block is always legal)."""
    if s <= target:
        return s
    t = (target // align) * align
    while t >= align:
        if s % t == 0:
            return t
        t -= align
    return s


def _pick_k_tile(d1, o_pad, w_itemsize, resident_budget=24 * 1024 * 1024):
    """Keep the whole (D1, O_pad) weight VMEM-resident when it fits the budget
    (sized for v7x's 64 MiB VMEM); otherwise K-tile on a 128 boundary."""
    if d1 * o_pad * w_itemsize <= resident_budget or d1 % 128 != 0:
        return d1
    # ~8 MiB per K slab (double-buffered -> ~16 MiB of weight traffic in flight).
    target = max(128, ((8 * 1024 * 1024) // (o_pad * w_itemsize)) // 128 * 128)
    tk = min(target, d1)
    while tk > 128 and d1 % tk != 0:
        tk -= 128
    return tk if d1 % tk == 0 else d1


# --------------------------------------------------------------------------- #
# Parameter preparation (do once, outside the hot path)
# --------------------------------------------------------------------------- #
def prepare_fuser_params(weight, bias, in_dim1, *, compute_dtype=jnp.bfloat16):
    """Split / transpose / lane-pad / cast the nn.Linear parameters once.

    weight: (out_dim, in_dim1 + in_dim2), bias: (out_dim,)   [PyTorch layout]
    """
    out_dim, in_total = weight.shape
    in_dim2 = in_total - in_dim1
    o_pad = max(128, _round_up(out_dim, 128))      # lane-dense output

    w1 = weight[:, :in_dim1].T                     # (D1, O)
    w2 = weight[:, in_dim1:].T                     # (D2, O)
    pad = o_pad - out_dim
    if pad:
        w1 = jnp.pad(w1, ((0, 0), (0, pad)))
        w2 = jnp.pad(w2, ((0, 0), (0, pad)))
        b = jnp.pad(bias, (0, pad))
    else:
        b = bias

    return dict(
        w1=jnp.asarray(w1, compute_dtype),         # bf16 MXU operand (main matmul)
        w2=jnp.asarray(w2, jnp.float32),           # tiny hoisted x2 projection stays f32
        bias=jnp.asarray(b, jnp.float32).reshape(1, o_pad),
        in_dim1=in_dim1,
        in_dim2=in_dim2,
        out_dim=out_dim,
        o_pad=o_pad,
    )


# --------------------------------------------------------------------------- #
# Kernel: one bf16 matmul per (batch, seq-tile, k-tile) step + prebias add
# --------------------------------------------------------------------------- #
def fuser_kernel(x1_ref, w1_ref, pb_ref, o_ref, acc_ref):
    k = pl.program_id(2)

    @pl.when(k == 0)
    def _():
        acc_ref[...] = jnp.zeros_like(acc_ref)

    x1 = x1_ref[0].astype(w1_ref.dtype)            # VPU cast -> bf16 MXU operands
    acc_ref[...] += jnp.dot(x1, w1_ref[...], preferred_element_type=jnp.float32)

    @pl.when(k == pl.num_programs(2) - 1)
    def _():
        # prebias = x2 @ W2 + bias, computed once per batch in the wrapper;
        # (1, O_pad) broadcasts over the seq-tile rows.
        o_ref[0] = (acc_ref[...] + pb_ref[0]).astype(o_ref.dtype)


# --------------------------------------------------------------------------- #
# Wrapper
# --------------------------------------------------------------------------- #
def fuser(x1, x2, params, *, seq_tile=None, k_tile=None):
    """x1: (B, S, D1), x2: (B, D2)  ->  (B, S, out_dim)."""
    B, S, D1 = x1.shape
    assert D1 == params["in_dim1"] and x2.shape == (B, params["in_dim2"])
    o_pad, out_dim, w1 = params["o_pad"], params["out_dim"], params["w1"]

    # Hoisted seq-invariant x2 contribution: one tiny XLA matmul per call.
    prebias = (x2.astype(jnp.float32) @ params["w2"] + params["bias"])   # (B, O_pad)
    prebias = prebias.reshape(B, 1, o_pad)

    ts = _pick_seq_tile(S) if seq_tile is None else seq_tile
    # TODO(synk): ragged S needs padding or a masked tail tile instead of this assert.
    assert S % ts == 0, "S must be a multiple of the seq tile"
    tk = _pick_k_tile(D1, o_pad, w1.dtype.itemsize) if k_tile is None else k_tile
    assert D1 % tk == 0
    nk = D1 // tk

    # VMEM budget (double-buffered tiles + weight + accumulator), capped at the
    # v7x physical VMEM of 64 MiB so the same policy is safe on v5e/v6e/v7x.
    need = (2 * ts * tk * x1.dtype.itemsize          # x1 tiles
            + 2 * tk * o_pad * w1.dtype.itemsize     # weight slab(s)
            + 2 * o_pad * 4                          # prebias
            + 2 * ts * o_pad * x1.dtype.itemsize     # out tiles
            + ts * o_pad * 4)                        # f32 accumulator
    vmem_limit = int(min(max(2 * need, 32 * 1024 * 1024), 64 * 1024 * 1024))

    cost = pl.CostEstimate(
        flops=2 * B * S * D1 * o_pad,
        transcendentals=0,
        bytes_accessed=(x1.size * x1.dtype.itemsize
                        + w1.size * w1.dtype.itemsize
                        + B * o_pad * 4
                        + B * S * o_pad * x1.dtype.itemsize),
    )

    def build_and_call(single_buffer_weight):
        if single_buffer_weight:
            # Constant-index resident weight: one VMEM copy instead of two.
            w_spec = pl.BlockSpec((tk, o_pad), lambda b, s, k: (k, 0),
                                  pipeline_mode=pl.Buffered(1))
        else:
            w_spec = pl.BlockSpec((tk, o_pad), lambda b, s, k: (k, 0))
        return pl.pallas_call(
            fuser_kernel,
            out_shape=jax.ShapeDtypeStruct((B, S, o_pad), x1.dtype),
            grid_spec=pltpu.PrefetchScalarGridSpec(
                num_scalar_prefetch=0,
                grid=(B, S // ts, nk),                       # reduction axis last
                in_specs=[
                    pl.BlockSpec((1, ts, tk), lambda b, s, k: (b, s, k)),   # x1 tile
                    w_spec,                                                  # W1
                    pl.BlockSpec((1, 1, o_pad), lambda b, s, k: (b, 0, 0)),  # prebias
                ],
                out_specs=pl.BlockSpec((1, ts, o_pad), lambda b, s, k: (b, s, 0)),
                scratch_shapes=[pltpu.VMEM((ts, o_pad), jnp.float32)],
            ),
            compiler_params=pltpu.CompilerParams(
                # B and S//ts shard across the 2 TensorCores on v7x; k is the reduction.
                dimension_semantics=("parallel", "parallel", "arbitrary"),
                vmem_limit_bytes=vmem_limit,
            ),
            cost_estimate=cost,
        )(x1, w1, prebias)

    if nk == 1:
        try:
            out_padded = build_and_call(True)
        except Exception:
            # pipeline_mode/Buffered(1) support varies across JAX versions; the
            # default double-buffered weight is already accounted for in the budget.
            out_padded = build_and_call(False)
    else:
        out_padded = build_and_call(False)

    return out_padded[..., :out_dim] if o_pad != out_dim else out_padded


# --------------------------------------------------------------------------- #
# Demo / correctness check
# --------------------------------------------------------------------------- #
if __name__ == "__main__":
    # Small shapes consistent with the module's forward:
    #   x1: (B, S, in_dim1), x2: (B, in_dim2)  ->  out: (B, S, out_dim)
    B, S, D1, D2, O = 2, 8, 32, 16, 32

    key = jax.random.PRNGKey(0)
    k1, k2, kw, kb = jax.random.split(key, 4)
    x1 = jax.random.normal(k1, (B, S, D1), dtype=jnp.float32)
    x2 = jax.random.normal(k2, (B, D2), dtype=jnp.float32)

    # Deterministic parameter init (same shapes as nn.Linear(D1+D2, O)).
    bound = 1.0 / jnp.sqrt(D1 + D2)
    weight = jax.random.uniform(kw, (O, D1 + D2), jnp.float32, -bound, bound)
    bias = jax.random.uniform(kb, (O,), jnp.float32, -bound, bound)

    params = prepare_fuser_params(weight, bias, in_dim1=D1)   # once, outside the hot path
    out = jax.block_until_ready(fuser(x1, x2, params))

    # Pure-JAX reference of the PyTorch semantics (repeat -> concat -> linear).
    x2_rep = jnp.broadcast_to(x2[:, None, :], (B, S, D2))
    ref = jnp.concatenate([x1, x2_rep], axis=-1) @ weight.T + bias

    assert out.shape == (B, S, O)
    # Main matmul runs in bf16 (f32 accumulation) -> relaxed tolerance vs f32 ref.
    assert jnp.allclose(out, ref, atol=5e-2, rtol=5e-2), float(jnp.max(jnp.abs(out - ref)))
    print("KERNEL_OK")
</pallas_src>

<mosaic_0001>
module attributes {stable_mosaic.version = 11 : i64} {
  func.func @fuser_kernel(%arg0: i32, %arg1: i32, %arg2: i32, %arg3: memref<1x8x32xf32, #tpu.memory_space<vmem>>, %arg4: memref<32x128xbf16, #tpu.memory_space<vmem>>, %arg5: memref<1x1x128xf32, #tpu.memory_space<vmem>>, %arg6: memref<1x8x128xf32, #tpu.memory_space<vmem>>, %arg7: memref<8x128xf32, #tpu.memory_space<vmem>>) attributes {dimension_semantics = [#tpu.dimension_semantics<parallel>, #tpu.dimension_semantics<parallel>, #tpu.dimension_semantics<arbitrary>], iteration_bounds = array<i64: 2, 1, 1>, scalar_prefetch = 0 : i64, scratch_operands = 1 : i64, tpu.core_type = #tpu.core_type<tc>, window_params = [{transform_indices = @transform_0, window_bounds = array<i64: 1, 8, 32>}, {pipeline_mode = #tpu.pipeline_mode<synchronous>, transform_indices = @transform_1, window_bounds = array<i64: 32, 128>}, {transform_indices = @transform_2, window_bounds = array<i64: 1, 1, 128>}, {transform_indices = @transform_3, window_bounds = array<i64: 1, 8, 128>}]} {
    %c0_i32 = arith.constant 0 : i32
    %0 = arith.cmpi eq, %arg2, %c0_i32 : i32
    %1 = arith.extui %0 : i1 to i32
    %c0_i32_0 = arith.constant 0 : i32
    %2 = arith.cmpi ne, %1, %c0_i32_0 : i32
    scf.if %2 {
      %cst_11 = arith.constant 0.000000e+00 : f32
      %14 = vector.broadcast %cst_11 : f32 to vector<8x128xf32>
      %c0_12 = arith.constant 0 : index
      %c0_13 = arith.constant 0 : index
      %15 = vector.load %arg7[%c0_12, %c0_13] : memref<8x128xf32, #tpu.memory_space<vmem>>, vector<8x128xf32>
      tpu.vector_store %arg7[%c0_12, %c0_13], %14 {strides = array<i32>} : memref<8x128xf32, #tpu.memory_space<vmem>>, vector<8x128xf32>,
    } else {
    }
    %c0 = arith.constant 0 : index
    %c0_1 = arith.constant 0 : index
    %c0_2 = arith.constant 0 : index
    %3 = vector.load %arg3[%c0, %c0_1, %c0_2] : memref<1x8x32xf32, #tpu.memory_space<vmem>>, vector<1x8x32xf32>
    %4 = vector.shape_cast %3 : vector<1x8x32xf32> to vector<8x32xf32>
    %5 = arith.truncf %4 : vector<8x32xf32> to vector<8x32xbf16>
    %c0_3 = arith.constant 0 : index
    %c0_4 = arith.constant 0 : index
    %6 = vector.load %arg7[%c0_3, %c0_4] : memref<8x128xf32, #tpu.memory_space<vmem>>, vector<8x128xf32>
    %c0_5 = arith.constant 0 : index
    %c0_6 = arith.constant 0 : index
    %7 = vector.load %arg4[%c0_5, %c0_6] : memref<32x128xbf16, #tpu.memory_space<vmem>>, vector<32x128xbf16>
    %cst = arith.constant dense<0.000000e+00> : vector<8x128xf32>
    %8 = tpu.matmul %5, %7, %cst {dimension_numbers = #tpu.dot_dimension_numbers<[1], [0], [0], [1], [0, 0, 1, 1], [], []>} : vector<8x32xbf16>, vector<32x128xbf16>, vector<8x128xf32> -> vector<8x128xf32>
    %9 = arith.addf %6, %8 : vector<8x128xf32>
    %c0_7 = arith.constant 0 : index
    %c0_8 = arith.constant 0 : index
    %10 = vector.load %arg7[%c0_7, %c0_8] : memref<8x128xf32, #tpu.memory_space<vmem>>, vector<8x128xf32>
    tpu.vector_store %arg7[%c0_7, %c0_8], %9 {strides = array<i32>} : memref<8x128xf32, #tpu.memory_space<vmem>>, vector<8x128xf32>,
    %c0_i32_9 = arith.constant 0 : i32
    %11 = arith.cmpi eq, %arg2, %c0_i32_9 : i32
    %12 = arith.extui %11 : i1 to i32
    %c0_i32_10 = arith.constant 0 : i32
    %13 = arith.cmpi ne, %12, %c0_i32_10 : i32
    scf.if %13 {
      %c0_11 = arith.constant 0 : index
      %c0_12 = arith.constant 0 : index
      %14 = vector.load %arg7[%c0_11, %c0_12] : memref<8x128xf32, #tpu.memory_space<vmem>>, vector<8x128xf32>
      %c0_13 = arith.constant 0 : index
      %c0_14 = arith.constant 0 : index
      %c0_15 = arith.constant 0 : index
      %15 = vector.load %arg5[%c0_13, %c0_14, %c0_15] : memref<1x1x128xf32, #tpu.memory_space<vmem>>, vector<1x1x128xf32>
      %16 = vector.shape_cast %15 : vector<1x1x128xf32> to vector<1x128xf32>
      %17 = vector.broadcast %16 : vector<1x128xf32> to vector<8x128xf32>
      %18 = arith.addf %14, %17 : vector<8x128xf32>
      %c0_16 = arith.constant 0 : index
      %c0_17 = arith.constant 0 : index
      %c0_18 = arith.constant 0 : index
      %19 = vector.load %arg6[%c0_16, %c0_17, %c0_18] : memref<1x8x128xf32, #tpu.memory_space<vmem>>, vector<1x8x128xf32>
      %20 = vector.shape_cast %19 : vector<1x8x128xf32> to vector<8x128xf32>
      %21 = vector.shape_cast %18 : vector<8x128xf32> to vector<1x8x128xf32>
      tpu.vector_store %arg6[%c0_16, %c0_17, %c0_18], %21 {strides = array<i32>} : memref<1x8x128xf32, #tpu.memory_space<vmem>>, vector<1x8x128xf32>,
    } else {
    }
    return
  }
  func.func @transform_0(%arg0: i32, %arg1: i32, %arg2: i32) -> (i32, i32, i32) {
    %c0_i32 = arith.constant 0 : i32
    return %arg0, %arg1, %arg2 : i32, i32, i32
  }
  func.func @transform_1(%arg0: i32, %arg1: i32, %arg2: i32) -> (i32, i32) {
    %c0_i32 = arith.constant 0 : i32
    %c0_i32_0 = arith.constant 0 : i32
    return %arg2, %c0_i32 : i32, i32
  }
  func.func @transform_2(%arg0: i32, %arg1: i32, %arg2: i32) -> (i32, i32, i32) {
    %c0_i32 = arith.constant 0 : i32
    %c0_i32_0 = arith.constant 0 : i32
    %c0_i32_1 = arith.constant 0 : i32
    return %arg0, %c0_i32, %c0_i32_0 : i32, i32, i32
  }
  func.func @transform_3(%arg0: i32, %arg1: i32, %arg2: i32) -> (i32, i32, i32) {
    %c0_i32 = arith.constant 0 : i32
    %c0_i32_0 = arith.constant 0 : i32
    return %arg0, %arg1, %c0_i32 : i32, i32, i32
  }
}

module attributes {stable_mosaic.version = 11 : i64} {
  func.func @fuser_kernel(%arg0: i32, %arg1: i32, %arg2: i32, %arg3: memref<1x8x32xf32, #tpu.memory_space<vmem>>, %arg4: memref<32x128xbf16, #tpu.memory_space<vmem>>, %arg5: memref<1x1x128xf32, #tpu.memory_space<vmem>>, %arg6: memref<1x8x128xf32, #tpu.memory_space<vmem>>, %arg7: memref<8x128xf32, #tpu.memory_space<vmem>>) attributes {dimension_semantics = [#tpu.dimension_semantics<parallel>, #tpu.dimension_semantics<parallel>, #tpu.dimension_semantics<arbitrary>], iteration_bounds = array<i64: 2, 1, 1>, scalar_prefetch = 0 : i64, scratch_operands = 1 : i64, tpu.core_type = #tpu.core_type<tc>, window_params = [{transform_indices = @transform_0, window_bounds = array<i64: 1, 8, 32>}, {transform_indices = @transform_1, window_bounds = array<i64: 32, 128>}, {transform_indices = @transform_2, window_bounds = array<i64: 1, 1, 128>}, {transform_indices = @transform_3, window_bounds = array<i64: 1, 8, 128>}]} {
    %c0_i32 = arith.constant 0 : i32
    %0 = arith.cmpi eq, %arg2, %c0_i32 : i32
    %1 = arith.extui %0 : i1 to i32
    %c0_i32_0 = arith.constant 0 : i32
    %2 = arith.cmpi ne, %1, %c0_i32_0 : i32
    scf.if %2 {
      %cst_11 = arith.constant 0.000000e+00 : f32
      %14 = vector.broadcast %cst_11 : f32 to vector<8x128xf32>
      %c0_12 = arith.constant 0 : index
      %c0_13 = arith.constant 0 : index
      %15 = vector.load %arg7[%c0_12, %c0_13] : memref<8x128xf32, #tpu.memory_space<vmem>>, vector<8x128xf32>
      tpu.vector_store %arg7[%c0_12, %c0_13], %14 {strides = array<i32>} : memref<8x128xf32, #tpu.memory_space<vmem>>, vector<8x128xf32>,
    } else {
    }
    %c0 = arith.constant 0 : index
    %c0_1 = arith.constant 0 : index
    %c0_2 = arith.constant 0 : index
    %3 = vector.load %arg3[%c0, %c0_1, %c0_2] : memref<1x8x32xf32, #tpu.memory_space<vmem>>, vector<1x8x32xf32>
    %4 = vector.shape_cast %3 : vector<1x8x32xf32> to vector<8x32xf32>
    %5 = arith.truncf %4 : vector<8x32xf32> to vector<8x32xbf16>
    %c0_3 = arith.constant 0 : index
    %c0_4 = arith.constant 0 : index
    %6 = vector.load %arg7[%c0_3, %c0_4] : memref<8x128xf32, #tpu.memory_space<vmem>>, vector<8x128xf32>
    %c0_5 = arith.constant 0 : index
    %c0_6 = arith.constant 0 : index
    %7 = vector.load %arg4[%c0_5, %c0_6] : memref<32x128xbf16, #tpu.memory_space<vmem>>, vector<32x128xbf16>
    %cst = arith.constant dense<0.000000e+00> : vector<8x128xf32>
    %8 = tpu.matmul %5, %7, %cst {dimension_numbers = #tpu.dot_dimension_numbers<[1], [0], [0], [1], [0, 0, 1, 1], [], []>} : vector<8x32xbf16>, vector<32x128xbf16>, vector<8x128xf32> -> vector<8x128xf32>
    %9 = arith.addf %6, %8 : vector<8x128xf32>
    %c0_7 = arith.constant 0 : index
    %c0_8 = arith.constant 0 : index
    %10 = vector.load %arg7[%c0_7, %c0_8] : memref<8x128xf32, #tpu.memory_space<vmem>>, vector<8x128xf32>
    tpu.vector_store %arg7[%c0_7, %c0_8], %9 {strides = array<i32>} : memref<8x128xf32, #tpu.memory_space<vmem>>, vector<8x128xf32>,
    %c0_i32_9 = arith.constant 0 : i32
    %11 = arith.cmpi eq, %arg2, %c0_i32_9 : i32
    %12 = arith.extui %11 : i1 to i32
    %c0_i32_10 = arith.constant 0 : i32
    %13 = arith.cmpi ne, %12, %c0_i32_10 : i32
    scf.if %13 {
      %c0_11 = arith.constant 0 : index
      %c0_12 = arith.constant 0 : index
      %14 = vector.load %arg7[%c0_11, %c0_12] : memref<8x128xf32, #tpu.memory_space<vmem>>, vector<8x128xf32>
      %c0_13 = arith.constant 0 : index
      %c0_14 = arith.constant 0 : index
      %c0_15 = arith.constant 0 : index
      %15 = vector.load %arg5[%c0_13, %c0_14, %c0_15] : memref<1x1x128xf32, #tpu.memory_space<vmem>>, vector<1x1x128xf32>
      %16 = vector.shape_cast %15 : vector<1x1x128xf32> to vector<1x128xf32>
      %17 = vector.broadcast %16 : vector<1x128xf32> to vector<8x128xf32>
      %18 = arith.addf %14, %17 : vector<8x128xf32>
      %c0_16 = arith.constant 0 : index
      %c0_17 = arith.constant 0 : index
      %c0_18 = arith.constant 0 : index
      %19 = vector.load %arg6[%c0_16, %c0_17, %c0_18] : memref<1x8x128xf32, #tpu.memory_space<vmem>>, vector<1x8x128xf32>
      %20 = vector.shape_cast %19 : vector<1x8x128xf32> to vector<8x128xf32>
      %21 = vector.shape_cast %18 : vector<8x128xf32> to vector<1x8x128xf32>
      tpu.vector_store %arg6[%c0_16, %c0_17, %c0_18], %21 {strides = array<i32>} : memref<1x8x128xf32, #tpu.memory_space<vmem>>, vector<1x8x128xf32>,
    } else {
    }
    return
  }
  func.func @transform_0(%arg0: i32, %arg1: i32, %arg2: i32) -> (i32, i32, i32) {
    %c0_i32 = arith.constant 0 : i32
    return %arg0, %arg1, %arg2 : i32, i32, i32
  }
  func.func @transform_1(%arg0: i32, %arg1: i32, %arg2: i32) -> (i32, i32) {
    %c0_i32 = arith.constant 0 : i32
    %c0_i32_0 = arith.constant 0 : i32
    return %arg2, %c0_i32 : i32, i32
  }
  func.func @transform_2(%arg0: i32, %arg1: i32, %arg2: i32) -> (i32, i32, i32) {
    %c0_i32 = arith.constant 0 : i32
    %c0_i32_0 = arith.constant 0 : i32
    %c0_i32_1 = arith.constant 0 : i32
    return %arg0, %c0_i32, %c0_i32_0 : i32, i32, i32
  }
  func.func @transform_3(%arg0: i32, %arg1: i32, %arg2: i32) -> (i32, i32, i32) {
    %c0_i32 = arith.constant 0 : i32
    %c0_i32_0 = arith.constant 0 : i32
    return %arg0, %arg1, %c0_i32 : i32, i32, i32
  }
}

</mosaic_0001>

<llo_original>
// kernel: tpu_custom_call.1
$region0: #{tpu_custom_call.1}
  #allocation0 [shape = 'u32[]', space=smem, size = 0x4, offset = 0x4, fixed_abs, tag = 'smem constant byte address 0x4 - core index']
  #allocation1 [shape = 'u32[144,128]{1,0:T(1,128)}', space=vmem, size = 0x12000, scoped, tag = 'internal scratch']
  #allocation2 [shape = 'f32[8,128]{1,0:T(8,128)}', space=vmem, size = 0x1000, scoped, tag = 'scratch operand']
  %s0 = inlined_call_operand.hbm [shape: f32[2,8,32], index: 0, kind: input, shape index: {}]
  %s1 = inlined_call_operand.hbm [shape: bf16[32,128], index: 1, kind: input, shape index: {}]
  %s2 = inlined_call_operand.vmem [shape: f32[2,1,128], index: 2, kind: input, shape index: {}]
  %s3 = inlined_call_operand.hbm [shape: f32[2,8,128], index: 3, kind: output, shape index: {}]
  %s4 = sld [smem:[#allocation0]]
  $region61: #{tpu_custom_call.1} parent=0
    _
  %s6 = ssub.s32 1, %s4
  %s7 = scalar_select 0, %s6, %s4
  $region1: #{tpu_custom_call.1} parent=0
    #allocation3 [shape = 'u8[8192]{0}', space=vmem, size = 0x2000, scoped, tag = 'input window, operand 0']
    #allocation4 [shape = 's32[2]{0}', space=sflag, size = 0x8, scoped, tag = 'scoped memory for tpu_custom_call.1']
    #allocation5 [shape = 's32[2]{0}', space=sflag, size = 0x8, scoped, tag = 'scoped memory for tpu_custom_call.1']
    #allocation6 [shape = 'u8[8192]{0}', space=vmem, size = 0x2000, scoped, tag = 'input window, operand 1, single buffered']
    #allocation7 [shape = 's32[1]{0}', space=sflag, size = 0x4, scoped, tag = 'scoped memory for tpu_custom_call.1']
    #allocation8 [shape = 'u8[8192]{0}', space=vmem, size = 0x2000, scoped, tag = 'output window, operand 0']
    %8 = vsyncpa [#allocation4], 0
    %s9 = scalar_lea.sflag [#allocation4], 1
    %10 = vsyncpa %s9, 0
    %11 = vsyncpa [#allocation7], 0
    %12 = vsyncpa [#allocation5], 0
    %s13 = scalar_lea.sflag [#allocation5], 1
    %14 = vsyncpa %s13, 0
    loop: start=0, step=1, limit=4
    $region2: #{tpu_custom_call.1} parent=1 // loop_pre_header
      _
    $region3: #{tpu_custom_call.1} parent=1 // loop_header
      %s16 = sphi 0, %s20
      %p17 = scmp.ge.s32.totalorder %s16, 4
      %s23 = sphi 0, %s42
      %s24 = sphi 0, %s38
      %s25 = sphi 0, %s34
      %s26 = sphi 0, %s23
      %s27 = sphi 0, %s24
      %s28 = sphi 0, %s25
      %s29 = sphi 0, %s26
      %s30 = sphi 0, %s27
      %s31 = sphi 0, %s28
      %s49 = sphi 0, %s51
      %s52 = sphi 0, %s49
      %s53 = sphi 0, %s52
      %s69 = sphi 0, %s53
      %s75 = sphi 0, %s77
      %s78 = sphi 0, %s75
      %s79 = sphi 0, %s78
      %s95 = sphi 0, %s79
      %s101 = sphi 0, %s103
      %s104 = sphi 0, %s101
      %s105 = sphi 0, %s104
      %s121 = sphi 0, %s105
      %s129 = sphi 0, %s131
      %s132 = sphi 0, %s129
      %s133 = sphi 0, %s132
      %s149 = sphi 0, %s133
    $region4: #{tpu_custom_call.1} parent=1 // loop_header_branch
      %19 = sbr.rel (%p17) target = $region8
    $region5: #{tpu_custom_call.1} parent=1 // loop_body
      %s21 = ssub.s32 %s16, 1
      %s22 = ssub.s32 %s16, 2
      %s32 = sadd.s32 1, %s25
      %p33 = scmp.ge.s32.totalorder %s32, 1
      %s34 = scalar_select %p33, 0, %s32
      %s35 = sadd.s32 1, %s24
      %s36 = scalar_select %p33, %s35, %s24
      %p37 = scmp.ge.s32.totalorder %s36, 1
      %s38 = scalar_select %p37, 0, %s36
      %s39 = sadd.s32 1, %s23
      %s40 = scalar_select %p37, %s39, %s23
      %p41 = scmp.ge.s32.totalorder %s40, 2
      %s42 = scalar_select %p41, 0, %s40
      %s43 = ssub.s32 %s23, %s42
      %s44 = ssub.s32 %s24, %s38
      %s45 = sor.u32 %s43, %s44
      %s46 = ssub.s32 %s25, %s34
      %s47 = sor.u32 %s45, %s46
      %p48 = scmp.eq.s32.totalorder %s47, 0
      %s50 = sadd.s32 %s49, 1
      %s51 = scalar_select %p48, %s49, %s50
      %p54 = pneg %p48
      %p55 = scmp.eq.s32.totalorder %s16, 1
      %p56 = por %p54, %p55
      %p57 = scmp.ne.s32.totalorder %s49, %s52
      %p58 = scmp.eq.s32.totalorder %s16, 0
      %p59 = por %p57, %p58
      %p60 = scmp.ne.s32.totalorder %s49, %s52
      %p61 = scmp.eq.s32.totalorder %s21, 1
      %p62 = por %p60, %p61
      %p63 = scmp.ne.s32.totalorder %s52, %s53
      %p64 = scmp.eq.s32.totalorder %s21, 0
      %p65 = por %p63, %p64
      %p66 = scmp.ne.s32.totalorder %s52, %s53
      %p67 = scmp.eq.s32.totalorder %s22, 1
      %p68 = por %p66, %p67
      %p70 = scmp.ne.s32.totalorder %s53, %s69
      %p71 = scmp.eq.s32.totalorder %s22, 0
      %p72 = por %p70, %p71
      %s73 = ssub.s32 %s25, %s34
      %p74 = scmp.eq.s32.totalorder %s73, 0
      %s76 = sadd.s32 %s75, 1
      %s77 = scalar_select %p74, %s75, %s76
      %p80 = pneg %p74
      %p81 = scmp.eq.s32.totalorder %s16, 1
      %p82 = por %p80, %p81
      %p83 = scmp.ne.s32.totalorder %s75, %s78
      %p84 = scmp.eq.s32.totalorder %s16, 0
      %p85 = por %p83, %p84
      %p86 = scmp.ne.s32.totalorder %s75, %s78
      %p87 = scmp.eq.s32.totalorder %s21, 1
      %p88 = por %p86, %p87
      %p89 = scmp.ne.s32.totalorder %s78, %s79
      %p90 = scmp.eq.s32.totalorder %s21, 0
      %p91 = por %p89, %p90
      %p92 = scmp.ne.s32.totalorder %s78, %s79
      %p93 = scmp.eq.s32.totalorder %s22, 1
      %p94 = por %p92, %p93
      %p96 = scmp.ne.s32.totalorder %s79, %s95
      %p97 = scmp.eq.s32.totalorder %s22, 0
      %p98 = por %p96, %p97
      %s99 = ssub.s32 %s23, %s42
      %p100 = scmp.eq.s32.totalorder %s99, 0
      %s102 = sadd.s32 %s101, 1
      %s103 = scalar_select %p100, %s101, %s102
      %p106 = pneg %p100
      %p107 = scmp.eq.s32.totalorder %s16, 1
      %p108 = por %p106, %p107
      %p109 = scmp.ne.s32.totalorder %s101, %s104
      %p110 = scmp.eq.s32.totalorder %s16, 0
      %p111 = por %p109, %p110
      %p112 = scmp.ne.s32.totalorder %s101, %s104
      %p113 = scmp.eq.s32.totalorder %s21, 1
      %p114 = por %p112, %p113
      %p115 = scmp.ne.s32.totalorder %s104, %s105
      %p116 = scmp.eq.s32.totalorder %s21, 0
      %p117 = por %p115, %p116
      %p118 = scmp.ne.s32.totalorder %s104, %s105
      %p119 = scmp.eq.s32.totalorder %s22, 1
      %p120 = por %p118, %p119
      %p122 = scmp.ne.s32.totalorder %s105, %s121
      %p123 = scmp.eq.s32.totalorder %s22, 0
      %p124 = por %p122, %p123
      %s125 = ssub.s32 %s23, %s42
      %s126 = ssub.s32 %s24, %s38
      %s127 = sor.u32 %s125, %s126
      %p128 = scmp.eq.s32.totalorder %s127, 0
      %s130 = sadd.s32 %s129, 1
      %s131 = scalar_select %p128, %s129, %s130
      %p134 = pneg %p128
      %p135 = scmp.eq.s32.totalorder %s16, 1
      %p136 = por %p134, %p135
      %p137 = scmp.ne.s32.totalorder %s129, %s132
      %p138 = scmp.eq.s32.totalorder %s16, 0
      %p139 = por %p137, %p138
      %p140 = scmp.ne.s32.totalorder %s129, %s132
      %p141 = scmp.eq.s32.totalorder %s21, 1
      %p142 = por %p140, %p141
      %p143 = scmp.ne.s32.totalorder %s132, %s133
      %p144 = scmp.eq.s32.totalorder %s21, 0
      %p145 = por %p143, %p144
      %p146 = scmp.ne.s32.totalorder %s132, %s133
      %p147 = scmp.eq.s32.totalorder %s22, 1
      %p148 = por %p146, %p147
      %p150 = scmp.ne.s32.totalorder %s133, %s149
      %p151 = scmp.eq.s32.totalorder %s22, 0
      %p152 = por %p150, %p151
      %p153 = scmp.le.s32.totalorder 1, %s16
      %p154 = scmp.lt.s32.totalorder %s16, 3
      %p155 = pnand %p153, %p154
      %p156 = pneg %p155
      // Predicated region
      $region9: #{tpu_custom_call.1} parent=5 // pred_check
        _
      $region10: #{tpu_custom_call.1} parent=5 // pred_check_branch
        %158 = sbr.rel (%p155) target = $region12
      $region11: #{tpu_custom_call.1} parent=5 // pred_region
        %s159 = ssub.s32 %s16, 1
        // Predicated region
        $region13: #{tpu_custom_call.1} parent=11 // pred_check
          %p160 = pneg %p91
        $region14: #{tpu_custom_call.1} parent=11 // pred_check_branch
          %162 = sbr.rel (%p160) target = $region16
        $region15: #{tpu_custom_call.1} parent=11 // pred_region
          %s163 = smul.u32 4, %s28
          %s165 = ssub.s32 256, 256
          %166 = vsyncadd [#allocation7], %s165
          %s167 = smul.addr %s163, 64
          %s168 = scalar_lea.hbm %s1, %s167
          %s169 = sshll.u32 [#allocation6], 4
          %s170 = int_to_ptr.vmem [resolvable:$true] %s169
          %175 = dma.hbm_to_vmem [thread:$0]  %s168, 256, %s170, [#allocation7], 64, 64, 4
        $region16: #{tpu_custom_call.1} parent=11 // pred_fallthru
          _
      $region12: #{tpu_custom_call.1} parent=5 // pred_fallthru
        _
      %p176 = scmp.lt.s32.totalorder %s16, 2
      // Predicated region
      $region17: #{tpu_custom_call.1} parent=5 // pred_check
        %p177 = pneg %p176
      $region18: #{tpu_custom_call.1} parent=5 // pred_check_branch
        %179 = sbr.rel (%p177) target = $region20
      $region19: #{tpu_custom_call.1} parent=5 // pred_region
        // Predicated region
        $region21: #{tpu_custom_call.1} parent=19 // pred_check
          %p180 = pneg %p59
        $region22: #{tpu_custom_call.1} parent=19 // pred_check_branch
          %182 = sbr.rel (%p180) target = $region24
        $region23: #{tpu_custom_call.1} parent=19 // pred_region
          %s183 = sand.u32 %s49, 1
          %s184 = scalar_lea.sflag [#allocation4], %s183
          %s185 = sand.u32 %s49, 1
          %s186 = smul.addr %s185, 8
          %s187 = scalar_lea.vmem [#allocation3], %s186
          %s189 = ssub.s32 128, 128
          %190 = vsyncadd %s184, %s189
          %s191 = sadd.s32 %s25, %s24
          %s192 = sadd.s32 %s191, %s23
          %s193 = smul.addr %s192, 128
          %s194 = scalar_lea.hbm %s0, %s193
          %s196 = sshll.u32 %s187, 4
          %s197 = int_to_ptr.vmem [resolvable:$true] %s196
          %199 = dma.hbm_to_vmem [thread:$0]  %s194, 128, %s197, %s184
        $region24: #{tpu_custom_call.1} parent=19 // pred_fallthru
          _
        // Predicated region
        $region25: #{tpu_custom_call.1} parent=19 // pred_check
          %p200 = pneg %p111
        $region26: #{tpu_custom_call.1} parent=19 // pred_check_branch
          %202 = sbr.rel (%p200) target = $region28
        $region27: #{tpu_custom_call.1} parent=19 // pred_region
          %p203 = scmp.lt.s32.totalorder %s23, 1
          %s204 = scalar_select %p203, %s23, 1
          %s205 = scalar_lea.vmem %s2, %s204
        $region28: #{tpu_custom_call.1} parent=19 // pred_fallthru
          _
      $region20: #{tpu_custom_call.1} parent=5 // pred_fallthru
        _
      %p206 = scmp.le.s32.totalorder 1, %s16
      %p207 = scmp.lt.s32.totalorder %s16, 3
      %p208 = pnand %p206, %p207
      %p209 = pneg %p208
      // Predicated region
      $region29: #{tpu_custom_call.1} parent=5 // pred_check
        _
      $region30: #{tpu_custom_call.1} parent=5 // pred_check_branch
        %211 = sbr.rel (%p208) target = $region32
      $region31: #{tpu_custom_call.1} parent=5 // pred_region
        %s212 = ssub.s32 %s16, 1
        %s213 = sand.u32 %s52, 1
        %s214 = scalar_lea.sflag [#allocation4], %s213
        %s215 = sand.u32 %s52, 1
        %s216 = smul.addr %s215, 8
        %s217 = scalar_lea.vmem [#allocation3], %s216
        // Predicated region
        $region33: #{tpu_custom_call.1} parent=31 // pred_check
          %p218 = pneg %p65
        $region34: #{tpu_custom_call.1} parent=31 // pred_check_branch
          %220 = sbr.rel (%p218) target = $region36
        $region35: #{tpu_custom_call.1} parent=31 // pred_region
          %221 = dma.done %s214, 128
        $region36: #{tpu_custom_call.1} parent=31 // pred_fallthru
          _
        // Predicated region
        $region37: #{tpu_custom_call.1} parent=31 // pred_check
          %p222 = pneg %p91
        $region38: #{tpu_custom_call.1} parent=31 // pred_check_branch
          %224 = sbr.rel (%p222) target = $region40
        $region39: #{tpu_custom_call.1} parent=31 // pred_region
          %225 = dma.done [#allocation7], 256
        $region40: #{tpu_custom_call.1} parent=31 // pred_fallthru
          _
        %s226 = sand.u32 %s52, 1
        %s227 = scalar_lea.sflag [#allocation4], %s226
        %s228 = sand.u32 %s52, 1
        %s229 = smul.addr %s228, 8
        %s230 = scalar_lea.vmem [#allocation3], %s229
        %p231 = pneg %p65
        %p232 = pneg %p62
        %p233 = pneg %p91
        %p234 = pneg %p88
        %p235 = scmp.lt.s32.totalorder %s26, 1
        %s236 = scalar_select %p235, %s26, 1
        %s237 = scalar_lea.vmem %s2, %s236
        %p238 = pneg %p117
        %p239 = pneg %p114
        %p240 = pneg %p145
        %p241 = pneg %p142
        %s242 = sand.u32 %s132, 1
        %s243 = scalar_lea.sflag [#allocation5], %s242
        %s244 = sand.u32 %s132, 1
        %s245 = smul.addr %s244, 8
        %s246 = scalar_lea.vmem [#allocation8], %s245
        %s247 = smul.u32 4, %s28
        %p248 = scmp.lt.s32.totalorder %s26, 1
        %s249 = scalar_select %p248, %s26, 1
        %s250 = scalar_lea.vmem %s2, %s249
        %p252 = scmp.eq.s32.totalorder %s28, 0
        // Predicated region
        $region41: #{tpu_custom_call.1} parent=31 // pred_check
          %p253 = pneg %p252
        $region42: #{tpu_custom_call.1} parent=31 // pred_check_branch
          %255 = sbr.rel (%p253) target = $region44
        $region43: #{tpu_custom_call.1} parent=31 // pred_region
          %256 = vst [vmem:[#allocation2] sm:$0xff] 0.0
        $region44: #{tpu_custom_call.1} parent=31 // pred_fallthru
          _
        %v257 = vld [vmem:[%s217] sm:$0xff]
        %v258 = vpack.c.bf16 %v257, %v257
        %v259 = vld [vmem:[#allocation2] sm:$0xff]
        %v260 = vld [vmem:[#allocation6] sm:$0xf]
        %v261 = vld [vmem:[#allocation6 + $0x4] sm:$0xf]
        %v262 = vld [vmem:[#allocation6 + $0x8] sm:$0xf]
        %v263 = vld [vmem:[#allocation6 + $0xc] sm:$0xf]
        %v268 = vunpack.c.l.b16 %v260
        %v269 = vunpack.c.l.b16 %v261
        %v270 = vunpack.c.l.b16 %v262
        %v271 = vunpack.c.l.b16 %v263
        %v272 = vpack.c.b16 %v269, %v268
        %v273 = vpack.c.b16 %v271, %v270
        %vm276 = vcmask 261120
        %v278 = vsel %vm276, %v258, 0
        %280 = vmatprep.subr.bf16.mxu0 0
        %281 = vmatpush1.bf16.msra.mxu0 %v272
        %282 = vmatprep.subr.bf16.mxu0 0
        %283 = vmatpush1.bf16.msra.mxu0 %v273
        %284 = vmatprep.subr.bf16.mxu0 0
        %285 = vmatpush1.bf16.msra.mxu0 0
        %286 = vmatprep.subr.bf16.mxu0 0
        %287 = vmatpush1.bf16.msra.mxu0 0
        %288 = vmatprep.subr.bf16.mxu0 0
        %289 = vmatpush1.bf16.msra.mxu0 0
        %290 = vmatprep.subr.bf16.mxu0 0
        %291 = vmatpush1.bf16.msra.mxu0 0
        %292 = vmatprep.subr.bf16.mxu0 0
        %293 = vmatpush1.bf16.msra.mxu0 0
        %294 = vmatprep.subr.bf16.mxu0 0
        %295 = vmatpush1.bf16.msra.mxu0 0
        %296 = vmatprep.subr.bf16.mxu0 0
        %297 = vmatpush1.bf16.msra.mxu0 0
        %298 = vmatprep.subr.bf16.mxu0 0
        %299 = vmatpush1.bf16.msra.mxu0 0
        %300 = vmatprep.subr.bf16.mxu0 0
        %301 = vmatpush1.bf16.msra.mxu0 0
        %302 = vmatprep.subr.bf16.mxu0 0
        %303 = vmatpush1.bf16.msra.mxu0 0
        %304 = vmatprep.subr.bf16.mxu0 0
        %305 = vmatpush1.bf16.msra.mxu0 0
        %306 = vmatprep.subr.bf16.mxu0 0
        %307 = vmatpush1.bf16.msra.mxu0 0
        %308 = vmatprep.subr.bf16.mxu0 0
        %309 = vmatpush1.bf16.msra.mxu0 0
        %310 = vmatprep.subr.bf16.mxu0 0
        %311 = vmatpush1.bf16.msra.mxu0 0
        %312 = vmatprep.mubr.bf16.mxu0 0
        %313 = vmatmul.mubr.bf16.gmra.mrb[0].mxu0 %v278
        %v314 = vpop.f32.mrb[0].mxu0
        %v315 = vadd.f32 0.0, %v314
        %v316 = vpop.f32.mrb[0].mxu0
        %v317 = vpop.f32.mrb[0].mxu0
        %v318 = vpop.f32.mrb[0].mxu0
        %319 = vdwg.mxu0
        %v320 = vadd.f32 %v259, %v315
        %321 = vst [vmem:[#allocation2] sm:$0xff] %v320
        // Predicated region
        $region45: #{tpu_custom_call.1} parent=31 // pred_check
          %p322 = pneg %p252
        $region46: #{tpu_custom_call.1} parent=31 // pred_check_branch
          %324 = sbr.rel (%p322) target = $region48
        $region47: #{tpu_custom_call.1} parent=31 // pred_region
          %v325 = vld [vmem:[#allocation2] sm:$0xff]
          %v326 = vld [vmem:[%s250] sm:$0x1]
          %v328 = vlaneseq
          %v329 = vshrl.u32 %v328, 7
          %v330 = vsub.s32 0, %v329
          %v331 = vrot.slane %v326, %v330
          %v333 = vadd.f32 %v325, %v331
          %334 = vst [vmem:[%s246] sm:$0xff] %v333
        $region48: #{tpu_custom_call.1} parent=31 // pred_fallthru
          _
        %s335 = sand.u32 %s132, 1
        %s336 = scalar_lea.sflag [#allocation5], %s335
        %s337 = sand.u32 %s132, 1
        %s338 = smul.addr %s337, 8
        %s339 = scalar_lea.vmem [#allocation8], %s338
        // Predicated region
        $region49: #{tpu_custom_call.1} parent=31 // pred_check
          %p340 = pneg %p142
        $region50: #{tpu_custom_call.1} parent=31 // pred_check_branch
          %342 = sbr.rel (%p340) target = $region52
        $region51: #{tpu_custom_call.1} parent=31 // pred_region
          %s344 = ssub.s32 128, 128
          %345 = vsyncadd %s336, %s344
          %s346 = sadd.s32 %s27, %s26
          %s347 = smul.addr %s346, 128
          %s348 = scalar_lea.hbm %s3, %s347
          %s350 = sshll.u32 %s339, 4
          %s351 = int_to_ptr.vmem [resolvable:$true] %s350
          %353 = dma.vmem_to_hbm [thread:$0]  %s351, 128, %s348, %s336
        $region52: #{tpu_custom_call.1} parent=31 // pred_fallthru
          _
      $region32: #{tpu_custom_call.1} parent=5 // pred_fallthru
        _
      %p354 = scmp.le.s32.totalorder 2, %s16
      // Predicated region
      $region53: #{tpu_custom_call.1} parent=5 // pred_check
        %p355 = pneg %p354
      $region54: #{tpu_custom_call.1} parent=5 // pred_check_branch
        %357 = sbr.rel (%p355) target = $region56
      $region55: #{tpu_custom_call.1} parent=5 // pred_region
        %s358 = ssub.s32 %s16, 2
        // Predicated region
        $region57: #{tpu_custom_call.1} parent=55 // pred_check
          %p359 = pneg %p148
        $region58: #{tpu_custom_call.1} parent=55 // pred_check_branch
          %361 = sbr.rel (%p359) target = $region60
        $region59: #{tpu_custom_call.1} parent=55 // pred_region
          %s362 = sand.u32 %s133, 1
          %s363 = scalar_lea.sflag [#allocation5], %s362
          %s364 = sand.u32 %s133, 1
          %s365 = smul.addr %s364, 8
          %s366 = scalar_lea.vmem [#allocation8], %s365
          %367 = dma.done %s363, 128
        $region60: #{tpu_custom_call.1} parent=55 // pred_fallthru
          _
      $region56: #{tpu_custom_call.1} parent=5 // pred_fallthru
        _
    $region6: #{tpu_custom_call.1} parent=1 // loop_footer
      %s20 = sadd.s32 1, %s16
    $region7: #{tpu_custom_call.1} parent=1 // loop_footer_branch
      %15 = sbr.rel target = $region3
    $region8: #{tpu_custom_call.1} parent=1 // loop_exit
      _
    %368 = vsyncpa [#allocation4], 1
    %s369 = scalar_lea.sflag [#allocation4], 1
    %370 = vsyncpa %s369, 1
    %371 = vsyncpa [#allocation7], 1
    %372 = vsyncpa [#allocation5], 1
    %s373 = scalar_lea.sflag [#allocation5], 1
    %374 = vsyncpa %s373, 1

// kernel: tpu_custom_call.1
$region0: #{tpu_custom_call.1}
  #allocation0 [shape = 'u32[]', space=smem, size = 0x4, offset = 0x4, fixed_abs, tag = 'smem constant byte address 0x4 - core index']
  #allocation1 [shape = 'u32[144,128]{1,0:T(1,128)}', space=vmem, size = 0x12000, scoped, tag = 'internal scratch']
  #allocation2 [shape = 'f32[8,128]{1,0:T(8,128)}', space=vmem, size = 0x1000, scoped, tag = 'scratch operand']
  %s0 = inlined_call_operand.hbm [shape: f32[2,8,32], index: 0, kind: input, shape index: {}]
  %s1 = inlined_call_operand.hbm [shape: bf16[32,128], index: 1, kind: input, shape index: {}]
  %s2 = inlined_call_operand.vmem [shape: f32[2,1,128], index: 2, kind: input, shape index: {}]
  %s3 = inlined_call_operand.hbm [shape: f32[2,8,128], index: 3, kind: output, shape index: {}]
  %s4 = sld [smem:[#allocation0]]
  $region61: #{tpu_custom_call.1} parent=0
    _
  %s6 = ssub.s32 1, %s4
  %s7 = scalar_select 0, %s6, %s4
  $region1: #{tpu_custom_call.1} parent=0
    #allocation3 [shape = 'u8[8192]{0}', space=vmem, size = 0x2000, scoped, tag = 'input window, operand 0']
    #allocation4 [shape = 's32[2]{0}', space=sflag, size = 0x8, scoped, tag = 'scoped memory for tpu_custom_call.1']
    #allocation5 [shape = 's32[2]{0}', space=sflag, size = 0x8, scoped, tag = 'scoped memory for tpu_custom_call.1']
    #allocation6 [shape = 'u8[8192]{0}', space=vmem, size = 0x2000, scoped, tag = 'input window, operand 1, single buffered']
    #allocation7 [shape = 's32[1]{0}', space=sflag, size = 0x4, scoped, tag = 'scoped memory for tpu_custom_call.1']
    #allocation8 [shape = 'u8[8192]{0}', space=vmem, size = 0x2000, scoped, tag = 'output window, operand 0']
    %8 = vsyncpa [#allocation4], 0
    %s9 = scalar_lea.sflag [#allocation4], 1
    %10 = vsyncpa %s9, 0
    %11 = vsyncpa [#allocation7], 0
    %12 = vsyncpa [#allocation5], 0
    %s13 = scalar_lea.sflag [#allocation5], 1
    %14 = vsyncpa %s13, 0
    loop: start=0, step=1, limit=4
    $region2: #{tpu_custom_call.1} parent=1 // loop_pre_header
      _
    $region3: #{tpu_custom_call.1} parent=1 // loop_header
      %s16 = sphi 0, %s20
      %p17 = scmp.ge.s32.totalorder %s16, 4
      %s23 = sphi 0, %s42
      %s24 = sphi 0, %s38
      %s25 = sphi 0, %s34
      %s26 = sphi 0, %s23
      %s27 = sphi 0, %s24
      %s28 = sphi 0, %s25
      %s29 = sphi 0, %s26
      %s30 = sphi 0, %s27
      %s31 = sphi 0, %s28
      %s49 = sphi 0, %s51
      %s52 = sphi 0, %s49
      %s53 = sphi 0, %s52
      %s69 = sphi 0, %s53
      %s75 = sphi 0, %s77
      %s78 = sphi 0, %s75
      %s79 = sphi 0, %s78
      %s95 = sphi 0, %s79
      %s101 = sphi 0, %s103
      %s104 = sphi 0, %s101
      %s105 = sphi 0, %s104
      %s121 = sphi 0, %s105
      %s129 = sphi 0, %s131
      %s132 = sphi 0, %s129
      %s133 = sphi 0, %s132
      %s149 = sphi 0, %s133
    $region4: #{tpu_custom_call.1} parent=1 // loop_header_branch
      %19 = sbr.rel (%p17) target = $region8
    $region5: #{tpu_custom_call.1} parent=1 // loop_body
      %s21 = ssub.s32 %s16, 1
      %s22 = ssub.s32 %s16, 2
      %s32 = sadd.s32 1, %s25
      %p33 = scmp.ge.s32.totalorder %s32, 1
      %s34 = scalar_select %p33, 0, %s32
      %s35 = sadd.s32 1, %s24
      %s36 = scalar_select %p33, %s35, %s24
      %p37 = scmp.ge.s32.totalorder %s36, 1
      %s38 = scalar_select %p37, 0, %s36
      %s39 = sadd.s32 1, %s23
      %s40 = scalar_select %p37, %s39, %s23
      %p41 = scmp.ge.s32.totalorder %s40, 2
      %s42 = scalar_select %p41, 0, %s40
      %s43 = ssub.s32 %s23, %s42
      %s44 = ssub.s32 %s24, %s38
      %s45 = sor.u32 %s43, %s44
      %s46 = ssub.s32 %s25, %s34
      %s47 = sor.u32 %s45, %s46
      %p48 = scmp.eq.s32.totalorder %s47, 0
      %s50 = sadd.s32 %s49, 1
      %s51 = scalar_select %p48, %s49, %s50
      %p54 = pneg %p48
      %p55 = scmp.eq.s32.totalorder %s16, 1
      %p56 = por %p54, %p55
      %p57 = scmp.ne.s32.totalorder %s49, %s52
      %p58 = scmp.eq.s32.totalorder %s16, 0
      %p59 = por %p57, %p58
      %p60 = scmp.ne.s32.totalorder %s49, %s52
      %p61 = scmp.eq.s32.totalorder %s21, 1
      %p62 = por %p60, %p61
      %p63 = scmp.ne.s32.totalorder %s52, %s53
      %p64 = scmp.eq.s32.totalorder %s21, 0
      %p65 = por %p63, %p64
      %p66 = scmp.ne.s32.totalorder %s52, %s53
      %p67 = scmp.eq.s32.totalorder %s22, 1
      %p68 = por %p66, %p67
      %p70 = scmp.ne.s32.totalorder %s53, %s69
      %p71 = scmp.eq.s32.totalorder %s22, 0
      %p72 = por %p70, %p71
      %s73 = ssub.s32 %s25, %s34
      %p74 = scmp.eq.s32.totalorder %s73, 0
      %s76 = sadd.s32 %s75, 1
      %s77 = scalar_select %p74, %s75, %s76
      %p80 = pneg %p74
      %p81 = scmp.eq.s32.totalorder %s16, 1
      %p82 = por %p80, %p81
      %p83 = scmp.ne.s32.totalorder %s75, %s78
      %p84 = scmp.eq.s32.totalorder %s16, 0
      %p85 = por %p83, %p84
      %p86 = scmp.ne.s32.totalorder %s75, %s78
      %p87 = scmp.eq.s32.totalorder %s21, 1
      %p88 = por %p86, %p87
      %p89 = scmp.ne.s32.totalorder %s78, %s79
      %p90 = scmp.eq.s32.totalorder %s21, 0
      %p91 = por %p89, %p90
      %p92 = scmp.ne.s32.totalorder %s78, %s79
      %p93 = scmp.eq.s32.totalorder %s22, 1
      %p94 = por %p92, %p93
      %p96 = scmp.ne.s32.totalorder %s79, %s95
      %p97 = scmp.eq.s32.totalorder %s22, 0
      %p98 = por %p96, %p97
      %s99 = ssub.s32 %s23, %s42
      %p100 = scmp.eq.s32.totalorder %s99, 0
      %s102 = sadd.s32 %s101, 1
      %s103 = scalar_select %p100, %s101, %s102
      %p106 = pneg %p100
      %p107 = scmp.eq.s32.totalorder %s16, 1
      %p108 = por %p106, %p107
      %p109 = scmp.ne.s32.totalorder %s101, %s104
      %p110 = scmp.eq.s32.totalorder %s16, 0
      %p111 = por %p109, %p110
      %p112 = scmp.ne.s32.totalorder %s101, %s104
      %p113 = scmp.eq.s32.totalorder %s21, 1
      %p114 = por %p112, %p113
      %p115 = scmp.ne.s32.totalorder %s104, %s105
      %p116 = scmp.eq.s32.totalorder %s21, 0
      %p117 = por %p115, %p116
      %p118 = scmp.ne.s32.totalorder %s104, %s105
      %p119 = scmp.eq.s32.totalorder %s22, 1
      %p120 = por %p118, %p119
      %p122 = scmp.ne.s32.totalorder %s105, %s121
      %p123 = scmp.eq.s32.totalorder %s22, 0
      %p124 = por %p122, %p123
      %s125 = ssub.s32 %s23, %s42
      %s126 = ssub.s32 %s24, %s38
      %s127 = sor.u32 %s125, %s126
      %p128 = scmp.eq.s32.totalorder %s127, 0
      %s130 = sadd.s32 %s129, 1
      %s131 = scalar_select %p128, %s129, %s130
      %p134 = pneg %p128
      %p135 = scmp.eq.s32.totalorder %s16, 1
      %p136 = por %p134, %p135
      %p137 = scmp.ne.s32.totalorder %s129, %s132
      %p138 = scmp.eq.s32.totalorder %s16, 0
      %p139 = por %p137, %p138
      %p140 = scmp.ne.s32.totalorder %s129, %s132
      %p141 = scmp.eq.s32.totalorder %s21, 1
      %p142 = por %p140, %p141
      %p143 = scmp.ne.s32.totalorder %s132, %s133
      %p144 = scmp.eq.s32.totalorder %s21, 0
      %p145 = por %p143, %p144
      %p146 = scmp.ne.s32.totalorder %s132, %s133
      %p147 = scmp.eq.s32.totalorder %s22, 1
      %p148 = por %p146, %p147
      %p150 = scmp.ne.s32.totalorder %s133, %s149
      %p151 = scmp.eq.s32.totalorder %s22, 0
      %p152 = por %p150, %p151
      %p153 = scmp.le.s32.totalorder 1, %s16
      %p154 = scmp.lt.s32.totalorder %s16, 3
      %p155 = pnand %p153, %p154
      %p156 = pneg %p155
      // Predicated region
      $region9: #{tpu_custom_call.1} parent=5 // pred_check
        _
      $region10: #{tpu_custom_call.1} parent=5 // pred_check_branch
        %158 = sbr.rel (%p155) target = $region12
      $region11: #{tpu_custom_call.1} parent=5 // pred_region
        %s159 = ssub.s32 %s16, 1
        // Predicated region
        $region13: #{tpu_custom_call.1} parent=11 // pred_check
          %p160 = pneg %p91
        $region14: #{tpu_custom_call.1} parent=11 // pred_check_branch
          %162 = sbr.rel (%p160) target = $region16
        $region15: #{tpu_custom_call.1} parent=11 // pred_region
          %s163 = smul.u32 4, %s28
          %s165 = ssub.s32 256, 256
          %166 = vsyncadd [#allocation7], %s165
          %s167 = smul.addr %s163, 64
          %s168 = scalar_lea.hbm %s1, %s167
          %s169 = sshll.u32 [#allocation6], 4
          %s170 = int_to_ptr.vmem [resolvable:$true] %s169
          %175 = dma.hbm_to_vmem [thread:$0]  %s168, 256, %s170, [#allocation7], 64, 64, 4
        $region16: #{tpu_custom_call.1} parent=11 // pred_fallthru
          _
      $region12: #{tpu_custom_call.1} parent=5 // pred_fallthru
        _
      %p176 = scmp.lt.s32.totalorder %s16, 2
      // Predicated region
      $region17: #{tpu_custom_call.1} parent=5 // pred_check
        %p177 = pneg %p176
      $region18: #{tpu_custom_call.1} parent=5 // pred_check_branch
        %179 = sbr.rel (%p177) target = $region20
      $region19: #{tpu_custom_call.1} parent=5 // pred_region
        // Predicated region
        $region21: #{tpu_custom_call.1} parent=19 // pred_check
          %p180 = pneg %p59
        $region22: #{tpu_custom_call.1} parent=19 // pred_check_branch
          %182 = sbr.rel (%p180) target = $region24
        $region23: #{tpu_custom_call.1} parent=19 // pred_region
          %s183 = sand.u32 %s49, 1
          %s184 = scalar_lea.sflag [#allocation4], %s183
          %s185 = sand.u32 %s49, 1
          %s186 = smul.addr %s185, 8
          %s187 = scalar_lea.vmem [#allocation3], %s186
          %s189 = ssub.s32 128, 128
          %190 = vsyncadd %s184, %s189
          %s191 = sadd.s32 %s25, %s24
          %s192 = sadd.s32 %s191, %s23
          %s193 = smul.addr %s192, 128
          %s194 = scalar_lea.hbm %s0, %s193
          %s196 = sshll.u32 %s187, 4
          %s197 = int_to_ptr.vmem [resolvable:$true] %s196
          %199 = dma.hbm_to_vmem [thread:$0]  %s194, 128, %s197, %s184
        $region24: #{tpu_custom_call.1} parent=19 // pred_fallthru
          _
        // Predicated region
        $region25: #{tpu_custom_call.1} parent=19 // pred_check
          %p200 = pneg %p111
        $region26: #{tpu_custom_call.1} parent=19 // pred_check_branch
          %202 = sbr.rel (%p200) target = $region28
        $region27: #{tpu_custom_call.1} parent=19 // pred_region
          %p203 = scmp.lt.s32.totalorder %s23, 1
          %s204 = scalar_select %p203, %s23, 1
          %s205 = scalar_lea.vmem %s2, %s204
        $region28: #{tpu_custom_call.1} parent=19 // pred_fallthru
          _
      $region20: #{tpu_custom_call.1} parent=5 // pred_fallthru
        _
      %p206 = scmp.le.s32.totalorder 1, %s16
      %p207 = scmp.lt.s32.totalorder %s16, 3
      %p208 = pnand %p206, %p207
      %p209 = pneg %p208
      // Predicated region
      $region29: #{tpu_custom_call.1} parent=5 // pred_check
        _
      $region30: #{tpu_custom_call.1} parent=5 // pred_check_branch
        %211 = sbr.rel (%p208) target = $region32
      $region31: #{tpu_custom_call.1} parent=5 // pred_region
        %s212 = ssub.s32 %s16, 1
        %s213 = sand.u32 %s52, 1
        %s214 = scalar_lea.sflag [#allocation4], %s213
        %s215 = sand.u32 %s52, 1
        %s216 = smul.addr %s215, 8
        %s217 = scalar_lea.vmem [#allocation3], %s216
        // Predicated region
        $region33: #{tpu_custom_call.1} parent=31 // pred_check
          %p218 = pneg %p65
        $region34: #{tpu_custom_call.1} parent=31 // pred_check_branch
          %220 = sbr.rel (%p218) target = $region36
        $region35: #{tpu_custom_call.1} parent=31 // pred_region
          %221 = dma.done %s214, 128
        $region36: #{tpu_custom_call.1} parent=31 // pred_fallthru
          _
        // Predicated region
        $region37: #{tpu_custom_call.1} parent=31 // pred_check
          %p222 = pneg %p91
        $region38: #{tpu_custom_call.1} parent=31 // pred_check_branch
          %224 = sbr.rel (%p222) target = $region40
        $region39: #{tpu_custom_call.1} parent=31 // pred_region
          %225 = dma.done [#allocation7], 256
        $region40: #{tpu_custom_call.1} parent=31 // pred_fallthru
          _
        %s226 = sand.u32 %s52, 1
        %s227 = scalar_lea.sflag [#allocation4], %s226
        %s228 = sand.u32 %s52, 1
        %s229 = smul.addr %s228, 8
        %s230 = scalar_lea.vmem [#allocation3], %s229
        %p231 = pneg %p65
        %p232 = pneg %p62
        %p233 = pneg %p91
        %p234 = pneg %p88
        %p235 = scmp.lt.s32.totalorder %s26, 1
        %s236 = scalar_select %p235, %s26, 1
        %s237 = scalar_lea.vmem %s2, %s236
        %p238 = pneg %p117
        %p239 = pneg %p114
        %p240 = pneg %p145
        %p241 = pneg %p142
        %s242 = sand.u32 %s132, 1
        %s243 = scalar_lea.sflag [#allocation5], %s242
        %s244 = sand.u32 %s132, 1
        %s245 = smul.addr %s244, 8
        %s246 = scalar_lea.vmem [#allocation8], %s245
        %s247 = smul.u32 4, %s28
        %p248 = scmp.lt.s32.totalorder %s26, 1
        %s249 = scalar_select %p248, %s26, 1
        %s250 = scalar_lea.vmem %s2, %s249
        %p252 = scmp.eq.s32.totalorder %s28, 0
        // Predicated region
        $region41: #{tpu_custom_call.1} parent=31 // pred_check
          %p253 = pneg %p252
        $region42: #{tpu_custom_call.1} parent=31 // pred_check_branch
          %255 = sbr.rel (%p253) target = $region44
        $region43: #{tpu_custom_call.1} parent=31 // pred_region
          %256 = vst [vmem:[#allocation2] sm:$0xff] 0.0
        $region44: #{tpu_custom_call.1} parent=31 // pred_fallthru
          _
        %v257 = vld [vmem:[%s217] sm:$0xff]
        %v258 = vpack.c.bf16 %v257, %v257
        %v259 = vld [vmem:[#allocation2] sm:$0xff]
        %v260 = vld [vmem:[#allocation6] sm:$0xf]
        %v261 = vld [vmem:[#allocation6 + $0x4] sm:$0xf]
        %v262 = vld [vmem:[#allocation6 + $0x8] sm:$0xf]
        %v263 = vld [vmem:[#allocation6 + $0xc] sm:$0xf]
        %v268 = vunpack.c.l.b16 %v260
        %v269 = vunpack.c.l.b16 %v261
        %v270 = vunpack.c.l.b16 %v262
        %v271 = vunpack.c.l.b16 %v263
        %v272 = vpack.c.b16 %v269, %v268
        %v273 = vpack.c.b16 %v271, %v270
        %vm276 = vcmask 261120
        %v278 = vsel %vm276, %v258, 0
        %280 = vmatprep.subr.bf16.mxu0 0
        %281 = vmatpush1.bf16.msra.mxu0 %v272
        %282 = vmatprep.subr.bf16.mxu0 0
        %283 = vmatpush1.bf16.msra.mxu0 %v273
        %284 = vmatprep.subr.bf16.mxu0 0
        %285 = vmatpush1.bf16.msra.mxu0 0
        %286 = vmatprep.subr.bf16.mxu0 0
        %287 = vmatpush1.bf16.msra.mxu0 0
        %288 = vmatprep.subr.bf16.mxu0 0
        %289 = vmatpush1.bf16.msra.mxu0 0
        %290 = vmatprep.subr.bf16.mxu0 0
        %291 = vmatpush1.bf16.msra.mxu0 0
        %292 = vmatprep.subr.bf16.mxu0 0
        %293 = vmatpush1.bf16.msra.mxu0 0
        %294 = vmatprep.subr.bf16.mxu0 0
        %295 = vmatpush1.bf16.msra.mxu0 0
        %296 = vmatprep.subr.bf16.mxu0 0
        %297 = vmatpush1.bf16.msra.mxu0 0
        %298 = vmatprep.subr.bf16.mxu0 0
        %299 = vmatpush1.bf16.msra.mxu0 0
        %300 = vmatprep.subr.bf16.mxu0 0
        %301 = vmatpush1.bf16.msra.mxu0 0
        %302 = vmatprep.subr.bf16.mxu0 0
        %303 = vmatpush1.bf16.msra.mxu0 0
        %304 = vmatprep.subr.bf16.mxu0 0
        %305 = vmatpush1.bf16.msra.mxu0 0
        %306 = vmatprep.subr.bf16.mxu0 0
        %307 = vmatpush1.bf16.msra.mxu0 0
        %308 = vmatprep.subr.bf16.mxu0 0
        %309 = vmatpush1.bf16.msra.mxu0 0
        %310 = vmatprep.subr.bf16.mxu0 0
        %311 = vmatpush1.bf16.msra.mxu0 0
        %312 = vmatprep.mubr.bf16.mxu0 0
        %313 = vmatmul.mubr.bf16.gmra.mrb[0].mxu0 %v278
        %v314 = vpop.f32.mrb[0].mxu0
        %v315 = vadd.f32 0.0, %v314
        %v316 = vpop.f32.mrb[0].mxu0
        %v317 = vpop.f32.mrb[0].mxu0
        %v318 = vpop.f32.mrb[0].mxu0
        %319 = vdwg.mxu0
        %v320 = vadd.f32 %v259, %v315
        %321 = vst [vmem:[#allocation2] sm:$0xff] %v320
        // Predicated region
        $region45: #{tpu_custom_call.1} parent=31 // pred_check
          %p322 = pneg %p252
        $region46: #{tpu_custom_call.1} parent=31 // pred_check_branch
          %324 = sbr.rel (%p322) target = $region48
        $region47: #{tpu_custom_call.1} parent=31 // pred_region
          %v325 = vld [vmem:[#allocation2] sm:$0xff]
          %v326 = vld [vmem:[%s250] sm:$0x1]
          %v328 = vlaneseq
          %v329 = vshrl.u32 %v328, 7
          %v330 = vsub.s32 0, %v329
          %v331 = vrot.slane %v326, %v330
          %v333 = vadd.f32 %v325, %v331
          %334 = vst [vmem:[%s246] sm:$0xff] %v333
        $region48: #{tpu_custom_call.1} parent=31 // pred_fallthru
          _
        %s335 = sand.u32 %s132, 1
        %s336 = scalar_lea.sflag [#allocation5], %s335
        %s337 = sand.u32 %s132, 1
        %s338 = smul.addr %s337, 8
        %s339 = scalar_lea.vmem [#allocation8], %s338
        // Predicated region
        $region49: #{tpu_custom_call.1} parent=31 // pred_check
          %p340 = pneg %p142
        $region50: #{tpu_custom_call.1} parent=31 // pred_check_branch
          %342 = sbr.rel (%p340) target = $region52
        $region51: #{tpu_custom_call.1} parent=31 // pred_region
          %s344 = ssub.s32 128, 128
          %345 = vsyncadd %s336, %s344
          %s346 = sadd.s32 %s27, %s26
          %s347 = smul.addr %s346, 128
          %s348 = scalar_lea.hbm %s3, %s347
          %s350 = sshll.u32 %s339, 4
          %s351 = int_to_ptr.vmem [resolvable:$true] %s350
          %353 = dma.vmem_to_hbm [thread:$0]  %s351, 128, %s348, %s336
        $region52: #{tpu_custom_call.1} parent=31 // pred_fallthru
          _
      $region32: #{tpu_custom_call.1} parent=5 // pred_fallthru
        _
      %p354 = scmp.le.s32.totalorder 2, %s16
      // Predicated region
      $region53: #{tpu_custom_call.1} parent=5 // pred_check
        %p355 = pneg %p354
      $region54: #{tpu_custom_call.1} parent=5 // pred_check_branch
        %357 = sbr.rel (%p355) target = $region56
      $region55: #{tpu_custom_call.1} parent=5 // pred_region
        %s358 = ssub.s32 %s16, 2
        // Predicated region
        $region57: #{tpu_custom_call.1} parent=55 // pred_check
          %p359 = pneg %p148
        $region58: #{tpu_custom_call.1} parent=55 // pred_check_branch
          %361 = sbr.rel (%p359) target = $region60
        $region59: #{tpu_custom_call.1} parent=55 // pred_region
          %s362 = sand.u32 %s133, 1
          %s363 = scalar_lea.sflag [#allocation5], %s362
          %s364 = sand.u32 %s133, 1
          %s365 = smul.addr %s364, 8
          %s366 = scalar_lea.vmem [#allocation8], %s365
          %367 = dma.done %s363, 128
        $region60: #{tpu_custom_call.1} parent=55 // pred_fallthru
          _
      $region56: #{tpu_custom_call.1} parent=5 // pred_fallthru
        _
    $region6: #{tpu_custom_call.1} parent=1 // loop_footer
      %s20 = sadd.s32 1, %s16
    $region7: #{tpu_custom_call.1} parent=1 // loop_footer_branch
      %15 = sbr.rel target = $region3
    $region8: #{tpu_custom_call.1} parent=1 // loop_exit
      _
    %368 = vsyncpa [#allocation4], 1
    %s369 = scalar_lea.sflag [#allocation4], 1
    %370 = vsyncpa %s369, 1
    %371 = vsyncpa [#allocation7], 1
    %372 = vsyncpa [#allocation5], 1
    %s373 = scalar_lea.sflag [#allocation5], 1
    %374 = vsyncpa %s373, 1

</llo_original>
